<compile_context>
chip_gen: v7x
topology: tpu7x:2x2x1
jax: 0.10.0
libtpu: 0.0.40
codegen_flags: <defaults>
</compile_context>

<pallas_src>
import jax
import jax.numpy as jnp
from jax.experimental import pallas as pl
from jax.experimental.pallas import tpu as pltpu


def _drop_path_kernel(x_ref, keep_ref, o_ref):
    # x_ref: (TB, TF) tile; keep_ref: (TB, 1) per-sample keep mask already
    # scaled by 1/keep_prob and cast to x's dtype. Pure broadcast-multiply.
    o_ref[...] = x_ref[...] * keep_ref[...]


def _round_up(x, m):
    return ((x + m - 1) // m) * m


def _cdiv(a, b):
    return -(-a // b)


def _choose_tiling(b, f, dtype_bytes, budget_bytes=2 << 20):
    """Pick padded dims and block shape: returns (bp, fp, tb, tf).

    Blocks are lane-dense (tf % 128 == 0 or tf == full fp) and, whenever an
    8-row full-F stripe fits the byte budget, batch-contiguous (full F per
    block) so each block is one contiguous HBM DMA.
    """
    fp = _round_up(f, 128)
    bp = _round_up(b, 8)
    row_bytes = fp * dtype_bytes

    if 8 * row_bytes <= budget_bytes:
        # Batch-major, full-F blocks.
        tb_max = max(8, (budget_bytes // row_bytes) // 8 * 8)
        if tb_max >= bp:
            return bp, fp, bp, fp
        n_b = _cdiv(bp, tb_max)
        tb = _round_up(_cdiv(bp, n_b), 8)
        return tb * n_b, fp, tb, fp

    # A single 8-row full-F stripe exceeds the budget: split the feature axis.
    tb = 8  # bp is a multiple of 8 here
    tf_max = max(128, (budget_bytes // (tb * dtype_bytes)) // 128 * 128)
    if tf_max >= fp:
        return bp, fp, tb, fp
    n_f = _cdiv(fp, tf_max)
    tf = _round_up(_cdiv(fp, n_f), 128)
    return bp, tf * n_f, tb, tf


def drop_path_pallas(
    x,
    drop_prob=0.0,
    training=False,
    scale_by_keep=True,
    key=None,
    seed=0,
    donate_x=False,
    block_budget_bytes=2 << 20,
):
    """Pallas implementation of drop_path. x: (B, ...) of any rank."""
    if drop_prob == 0.0 or not training:
        return x

    orig_shape = x.shape
    b = orig_shape[0]
    xf = x.reshape(b, -1)  # (B, F)
    f = xf.shape[1]
    keep_prob = 1.0 - float(drop_prob)

    # Per-sample Bernoulli(keep_prob) mask, drawn once outside the kernel.
    if key is None:
        key = jax.random.PRNGKey(seed)
    keep = jax.random.bernoulli(key, keep_prob, shape=(b, 1)).astype(x.dtype)
    if scale_by_keep and drop_prob < 1.0:
        keep = keep * jnp.asarray(1.0 / keep_prob, dtype=x.dtype)

    dtype_bytes = jnp.dtype(x.dtype).itemsize
    bp, fp, tb, tf = _choose_tiling(b, f, dtype_bytes, block_budget_bytes)

    if (bp, fp) != (b, f):
        xf = jnp.pad(xf, ((0, bp - b), (0, fp - f)))
    if bp != b:
        keep = jnp.pad(keep, ((0, bp - b), (0, 0)))

    grid = (bp // tb, fp // tf)

    out = pl.pallas_call(
        _drop_path_kernel,
        out_shape=jax.ShapeDtypeStruct((bp, fp), xf.dtype),
        grid=grid,
        in_specs=[
            # Batch-contiguous (or lane-dense feature-split) data tile.
            pl.BlockSpec((tb, tf), lambda i, j: (i, j)),
            # Per-sample mask: only the batch-tile rows of the (bp, 1) mask.
            pl.BlockSpec((tb, 1), lambda i, j: (i, 0)),
        ],
        out_specs=pl.BlockSpec((tb, tf), lambda i, j: (i, j)),
        compiler_params=pltpu.CompilerParams(
            dimension_semantics=("parallel", "parallel"),
        ),
        input_output_aliases=({0: 0} if donate_x else {}),
    )(xf, keep)

    return out[:b, :f].reshape(orig_shape)


class DropPath:
    """Drop paths (stochastic depth) per sample — Pallas/TPU version."""

    def __init__(self, drop_prob: float = 0.0, scale_by_keep: bool = True):
        self.drop_prob = drop_prob
        self.scale_by_keep = scale_by_keep

    def __call__(self, x, training: bool = False, key=None, seed: int = 0):
        # Pass a fresh `key` (or `seed`) per call for real stochastic depth.
        return drop_path_pallas(
            x, self.drop_prob, training, self.scale_by_keep, key=key, seed=seed
        )


def _check_drop_path(x, y, keep_prob):
    xf = x.reshape(x.shape[0], -1)
    yf = y.reshape(y.shape[0], -1)
    for i in range(x.shape[0]):
        kept = bool(jnp.allclose(yf[i], xf[i] / keep_prob, rtol=1e-5, atol=1e-5))
        dropped = bool(jnp.allclose(yf[i], 0.0, atol=1e-6))
        assert kept or dropped, f"sample {i}: output is neither kept nor dropped"


if __name__ == "__main__":
    root = jax.random.PRNGKey(0)
    k_x1, k_x2, k_m1, k_m2 = jax.random.split(root, 4)

    drop_prob = 0.3
    keep_prob = 1.0 - drop_prob
    module = DropPath(drop_prob=drop_prob, scale_by_keep=True)

    # Case 1: nicely shaped input (F is already a multiple of 128).
    x1 = jax.random.normal(k_x1, (2, 4, 16, 16), dtype=jnp.float32)
    y1 = jax.block_until_ready(module(x1, training=True, key=k_m1))
    _check_drop_path(x1, y1, keep_prob)

    # Case 2: awkward shape (B=3, F=315) exercising the lane/row padding path.
    x2 = jax.random.normal(k_x2, (3, 5, 7, 9), dtype=jnp.float32)
    y2 = jax.block_until_ready(module(x2, training=True, key=k_m2))
    _check_drop_path(x2, y2, keep_prob)

    # Eval mode (or drop_prob == 0): identity.
    y_eval = jax.block_until_ready(module(x1, training=False))
    assert jnp.allclose(y_eval, x1)

    print("KERNEL_OK")
</pallas_src>

<mosaic_0001>
module attributes {stable_mosaic.version = 11 : i64} {
  func.func @_drop_path_kernel(%arg0: i32, %arg1: i32, %arg2: memref<8x1024xf32, #tpu.memory_space<vmem>>, %arg3: memref<8x1xf32, #tpu.memory_space<vmem>>, %arg4: memref<8x1024xf32, #tpu.memory_space<vmem>>) attributes {dimension_semantics = [#tpu.dimension_semantics<parallel>, #tpu.dimension_semantics<parallel>], iteration_bounds = array<i64: 1, 1>, scalar_prefetch = 0 : i64, scratch_operands = 0 : i64, tpu.core_type = #tpu.core_type<tc>, window_params = [{transform_indices = @transform_0, window_bounds = array<i64: 8, 1024>}, {transform_indices = @transform_1, window_bounds = array<i64: 8, 1>}, {transform_indices = @transform_2, window_bounds = array<i64: 8, 1024>}]} {
    %c0 = arith.constant 0 : index
    %c0_0 = arith.constant 0 : index
    %0 = vector.load %arg2[%c0, %c0_0] : memref<8x1024xf32, #tpu.memory_space<vmem>>, vector<8x1024xf32>
    %c0_1 = arith.constant 0 : index
    %c0_2 = arith.constant 0 : index
    %1 = vector.load %arg3[%c0_1, %c0_2] : memref<8x1xf32, #tpu.memory_space<vmem>>, vector<8x1xf32>
    %2 = vector.broadcast %1 : vector<8x1xf32> to vector<8x1024xf32>
    %3 = arith.mulf %0, %2 : vector<8x1024xf32>
    %c0_3 = arith.constant 0 : index
    %c0_4 = arith.constant 0 : index
    %4 = vector.load %arg4[%c0_3, %c0_4] : memref<8x1024xf32, #tpu.memory_space<vmem>>, vector<8x1024xf32>
    tpu.vector_store %arg4[%c0_3, %c0_4], %3 {strides = array<i32>} : memref<8x1024xf32, #tpu.memory_space<vmem>>, vector<8x1024xf32>,
    return
  }
  func.func @transform_0(%arg0: i32, %arg1: i32) -> (i32, i32) {
    %c0_i32 = arith.constant 0 : i32
    return %arg0, %arg1 : i32, i32
  }
  func.func @transform_1(%arg0: i32, %arg1: i32) -> (i32, i32) {
    %c0_i32 = arith.constant 0 : i32
    %c0_i32_0 = arith.constant 0 : i32
    return %arg0, %c0_i32 : i32, i32
  }
  func.func @transform_2(%arg0: i32, %arg1: i32) -> (i32, i32) {
    %c0_i32 = arith.constant 0 : i32
    return %arg0, %arg1 : i32, i32
  }
}

</mosaic_0001>

<llo_original>
// kernel: tpu_custom_call.1
$region0: #{tpu_custom_call.1}
  #allocation0 [shape = 'u32[]', space=smem, size = 0x4, offset = 0x4, fixed_abs, tag = 'smem constant byte address 0x4 - core index']
  #allocation1 [shape = 'u32[144,128]{1,0:T(1,128)}', space=vmem, size = 0x12000, scoped, tag = 'internal scratch']
  %s0 = inlined_call_operand.hbm [shape: f32[8,1024], index: 0, kind: input, shape index: {}]
  %s1 = inlined_call_operand.vmem [shape: f32[8,1], index: 1, kind: input, shape index: {}]
  %s2 = inlined_call_operand.hbm [shape: f32[8,1024], index: 2, kind: output, shape index: {}]
  %s3 = sld [smem:[#allocation0]]
  $region22: #{tpu_custom_call.1} parent=0
    _
  %s5 = ssub.s32 1, %s3
  %s6 = scalar_select 0, %s5, %s3
  $region1: #{tpu_custom_call.1} parent=0
    #allocation2 [shape = 'u8[32768]{0}', space=vmem, size = 0x8000, scoped, tag = 'input window, operand 0, single buffered']
    #allocation3 [shape = 's32[1]{0}', space=sflag, size = 0x4, scoped, tag = 'scoped memory for tpu_custom_call.1']
    #allocation4 [shape = 's32[1]{0}', space=sflag, size = 0x4, scoped, tag = 'scoped memory for tpu_custom_call.1']
    #allocation5 [shape = 'u8[32768]{0}', space=vmem, size = 0x8000, scoped, tag = 'output window, operand 0, single buffered']
    %7 = vsyncpa [#allocation3], 0
    %8 = vsyncpa [#allocation4], 0
    // Predicated region
    $region2: #{tpu_custom_call.1} parent=1 // pred_check
      _
    $region3: #{tpu_custom_call.1} parent=1 // pred_check_branch
      %10 = sbr.rel (0) target = $region5
    $region4: #{tpu_custom_call.1} parent=1 // pred_region
      %s12 = ssub.s32 1024, 1024
      %13 = vsyncadd [#allocation3], %s12
      %s15 = sshll.u32 [#allocation2], 4
      %s16 = int_to_ptr.vmem [resolvable:$true] %s15
      %18 = dma.hbm_to_vmem [thread:$0]  %s0, 1024, %s16, [#allocation3]
    $region5: #{tpu_custom_call.1} parent=1 // pred_fallthru
      _
    // Predicated region
    $region6: #{tpu_custom_call.1} parent=1 // pred_check
      _
    $region7: #{tpu_custom_call.1} parent=1 // pred_check_branch
      %20 = sbr.rel (0) target = $region9
    $region8: #{tpu_custom_call.1} parent=1 // pred_region
      _
    $region9: #{tpu_custom_call.1} parent=1 // pred_fallthru
      _
    // Predicated region
    $region10: #{tpu_custom_call.1} parent=1 // pred_check
      _
    $region11: #{tpu_custom_call.1} parent=1 // pred_check_branch
      %22 = sbr.rel (0) target = $region13
    $region12: #{tpu_custom_call.1} parent=1 // pred_region
      %23 = dma.done [#allocation3], 1024
    $region13: #{tpu_custom_call.1} parent=1 // pred_fallthru
      _
    %v24 = vld [vmem:[#allocation2] sm:$0xff]
    %v25 = vld [vmem:[#allocation2 + $0x8] sm:$0xff]
    %v26 = vld [vmem:[#allocation2 + $0x10] sm:$0xff]
    %v27 = vld [vmem:[#allocation2 + $0x18] sm:$0xff]
    %v28 = vld [vmem:[#allocation2 + $0x20] sm:$0xff]
    %v29 = vld [vmem:[#allocation2 + $0x28] sm:$0xff]
    %v30 = vld [vmem:[#allocation2 + $0x30] sm:$0xff]
    %v31 = vld [vmem:[#allocation2 + $0x38] sm:$0xff]
    %v32 = vld [vmem:[%s1] sm:$0xff]
    %34 = vset.pattern.permute.xlu0 0
    %35 = vperm.xlu0 %34, %v32
    %v36 = vpop.permute.xlu0 %35
    %v38 = vmul.f32 %v24, %v36
    %v39 = vmul.f32 %v25, %v36
    %v40 = vmul.f32 %v26, %v36
    %v41 = vmul.f32 %v27, %v36
    %v42 = vmul.f32 %v28, %v36
    %v43 = vmul.f32 %v29, %v36
    %v44 = vmul.f32 %v30, %v36
    %v45 = vmul.f32 %v31, %v36
    %46 = vst [vmem:[#allocation5] sm:$0xff] %v38
    %47 = vst [vmem:[#allocation5 + $0x8] sm:$0xff] %v39
    %48 = vst [vmem:[#allocation5 + $0x10] sm:$0xff] %v40
    %49 = vst [vmem:[#allocation5 + $0x18] sm:$0xff] %v41
    %50 = vst [vmem:[#allocation5 + $0x20] sm:$0xff] %v42
    %51 = vst [vmem:[#allocation5 + $0x28] sm:$0xff] %v43
    %52 = vst [vmem:[#allocation5 + $0x30] sm:$0xff] %v44
    %53 = vst [vmem:[#allocation5 + $0x38] sm:$0xff] %v45
    // Predicated region
    $region14: #{tpu_custom_call.1} parent=1 // pred_check
      _
    $region15: #{tpu_custom_call.1} parent=1 // pred_check_branch
      %55 = sbr.rel (0) target = $region17
    $region16: #{tpu_custom_call.1} parent=1 // pred_region
      %s57 = ssub.s32 1024, 1024
      %58 = vsyncadd [#allocation4], %s57
      %s60 = sshll.u32 [#allocation5], 4
      %s61 = int_to_ptr.vmem [resolvable:$true] %s60
      %63 = dma.vmem_to_hbm [thread:$0]  %s61, 1024, %s2, [#allocation4]
    $region17: #{tpu_custom_call.1} parent=1 // pred_fallthru
      _
    // Predicated region
    $region18: #{tpu_custom_call.1} parent=1 // pred_check
      _
    $region19: #{tpu_custom_call.1} parent=1 // pred_check_branch
      %65 = sbr.rel (0) target = $region21
    $region20: #{tpu_custom_call.1} parent=1 // pred_region
      %66 = dma.done [#allocation4], 1024
    $region21: #{tpu_custom_call.1} parent=1 // pred_fallthru
      _
    %67 = vsyncpa [#allocation3], 1
    %68 = vsyncpa [#allocation4], 1

</llo_original>
